<compile_context>
chip_gen: v7x
topology: tpu7x:2x2x1
jax: 0.10.0
libtpu: 0.0.40
codegen_flags: <defaults>
</compile_context>

<pallas_src>
import functools

import jax
import jax.numpy as jnp
from jax.experimental import pallas as pl
from jax.experimental.pallas import tpu as pltpu

LANES = 128
TARGET_BLOCK_BYTES = 2 * 1024 * 1024     # ~2 MiB per block (x2 in/out, x2 buffers ≈ 8 MiB VMEM)
_MIN_PALLAS_BYTES = 256 * 1024           # below this, plain jnp beats a custom-call launch


def _threshold_kernel(thr_ref, x_ref, o_ref, *, bin_op):
    # thr_ref: (1,) float32 scalar living in SMEM; x_ref/o_ref: (block_rows, cols) VMEM tiles.
    x = x_ref[...]
    t = thr_ref[0].astype(x.dtype)
    o_ref[...] = bin_op(x, t).astype(o_ref.dtype)


def _thresholding_2d(x2d, thr_arr, bin_op, block_rows):
    rows, cols = x2d.shape
    grid = (pl.cdiv(rows, block_rows),)
    kernel = functools.partial(_threshold_kernel, bin_op=bin_op)
    return pl.pallas_call(
        kernel,
        out_shape=jax.ShapeDtypeStruct((rows, cols), x2d.dtype),
        grid_spec=pltpu.PrefetchScalarGridSpec(
            num_scalar_prefetch=0,
            grid=grid,
            in_specs=[
                # scalar threshold, whole array resident in SMEM every step
                pl.BlockSpec(memory_space=pltpu.MemorySpace.SMEM),
                pl.BlockSpec((block_rows, cols), lambda i: (i, 0)),
            ],
            out_specs=pl.BlockSpec((block_rows, cols), lambda i: (i, 0)),
        ),
        compiler_params=pltpu.CompilerParams(
            dimension_semantics=("parallel",),
        ),
    )(thr_arr, x2d)


def thresholding(x, threshold, bin_op=jnp.greater_equal, force_pallas=False):
    """JAX/Pallas equivalent of Thresholding.forward.

    threshold=None -> identity (matches the PyTorch module).
    bin_op defaults to >= (torch.ge).
    """
    if threshold is None:
        return x

    orig_shape = x.shape
    orig_dtype = x.dtype
    itemsize = jnp.dtype(orig_dtype).itemsize
    n = x.size
    nbytes = n * itemsize

    # Tiny tensors: launching a custom call costs more than the compare itself.
    if not force_pallas and nbytes < _MIN_PALLAS_BYTES:
        t = jnp.asarray(threshold, dtype=orig_dtype)
        return bin_op(x, t).astype(orig_dtype)

    # dtype-aware sublane packing: 8 rows/vreg f32, 16 bf16, 32 int8/fp8
    pack = max(8, 32 // itemsize)
    cols = pack * LANES

    flat = x.reshape(-1)
    n_pad = (-n) % cols
    if n_pad:
        # Ragged tail: only now do we pay for an extra pad pass.
        flat = jnp.pad(flat, (0, n_pad))
    rows = flat.shape[0] // cols
    x2d = flat.reshape(rows, cols)

    # ~2 MiB blocks, rows a multiple of the dtype pack.
    block_rows = max(pack, TARGET_BLOCK_BYTES // (cols * itemsize))
    block_rows = (block_rows // pack) * pack
    if block_rows >= rows:
        if rows >= 2 * pack:
            # keep >= 2 grid steps so v7x's two TensorCores both get work
            block_rows = max(pack, (rows // 2 // pack) * pack)
        else:
            block_rows = rows  # full-dim block (allowed even if < 8 rows)

    thr_arr = jnp.asarray(threshold, dtype=jnp.float32).reshape(1)
    out2d = _thresholding_2d(x2d, thr_arr, bin_op, block_rows)

    out = out2d.reshape(-1)
    if n_pad:
        out = out[:n]
    return out.reshape(orig_shape).astype(orig_dtype)


if __name__ == "__main__":
    key = jax.random.PRNGKey(0)
    k1, k2 = jax.random.split(key)
    thr = 0.5

    # small NCHW-style probability tensor (forces the Pallas path)
    x_small = jax.random.uniform(k1, (2, 4, 16, 16), dtype=jnp.float32)
    out_small = jax.block_until_ready(thresholding(x_small, thr, force_pallas=True))
    ref_small = (x_small >= thr).astype(x_small.dtype)
    assert out_small.shape == x_small.shape and out_small.dtype == x_small.dtype
    assert bool(jnp.all(out_small == ref_small))

    # larger tensor: multi-step grid / big lane-dense blocks, auto path
    x_big = jax.random.uniform(k2, (4, 8, 64, 128), dtype=jnp.float32)  # 1 MiB
    out_big = jax.block_until_ready(thresholding(x_big, thr))
    ref_big = (x_big >= thr).astype(x_big.dtype)
    assert bool(jnp.all(out_big == ref_big))

    # bf16: exercises dtype-aware packing (16-row sublane pack, 2048-wide slab)
    x_bf = x_big.astype(jnp.bfloat16)
    out_bf = jax.block_until_ready(thresholding(x_bf, thr, force_pallas=True))
    ref_bf = (x_bf >= jnp.asarray(thr, dtype=jnp.bfloat16)).astype(jnp.bfloat16)
    assert out_bf.dtype == jnp.bfloat16
    assert bool(jnp.all(out_bf == ref_bf))

    # threshold=None path is identity
    out_none = jax.block_until_ready(thresholding(x_small, None))
    assert bool(jnp.all(out_none == x_small))

    # small-size automatic (jnp fallback) path matches too
    out_auto = jax.block_until_ready(thresholding(x_small, thr))
    assert bool(jnp.all(out_auto == ref_small))

    print("KERNEL_OK")
</pallas_src>

<mosaic_0001>
module attributes {stable_mosaic.version = 11 : i64} {
  func.func @_threshold_kernel(%arg0: i32, %arg1: memref<1xf32, #tpu.memory_space<smem>>, %arg2: memref<2x1024xf32, #tpu.memory_space<vmem>>, %arg3: memref<2x1024xf32, #tpu.memory_space<vmem>>) attributes {dimension_semantics = [#tpu.dimension_semantics<parallel>], iteration_bounds = array<i64: 1>, scalar_prefetch = 0 : i64, scratch_operands = 0 : i64, tpu.core_type = #tpu.core_type<tc>, window_params = [{transform_indices = @transform_0, window_bounds = array<i64: 1>}, {transform_indices = @transform_1, window_bounds = array<i64: 2, 1024>}, {transform_indices = @transform_2, window_bounds = array<i64: 2, 1024>}]} {
    %c0 = arith.constant 0 : index
    %c0_0 = arith.constant 0 : index
    %0 = vector.load %arg2[%c0, %c0_0] : memref<2x1024xf32, #tpu.memory_space<vmem>>, vector<2x1024xf32>
    %c0_1 = arith.constant 0 : index
    %1 = memref.load %arg1[%c0_1] : memref<1xf32, #tpu.memory_space<smem>>
    %2 = vector.broadcast %1 : f32 to vector<2x1024xf32>
    %3 = arith.cmpf oge, %0, %2 : vector<2x1024xf32>
    %4 = arith.extui %3 : vector<2x1024xi1> to vector<2x1024xi32>
    %5 = arith.sitofp %4 : vector<2x1024xi32> to vector<2x1024xf32>
    %c0_2 = arith.constant 0 : index
    %c0_3 = arith.constant 0 : index
    %6 = vector.load %arg3[%c0_2, %c0_3] : memref<2x1024xf32, #tpu.memory_space<vmem>>, vector<2x1024xf32>
    tpu.vector_store %arg3[%c0_2, %c0_3], %5 {strides = array<i32>} : memref<2x1024xf32, #tpu.memory_space<vmem>>, vector<2x1024xf32>,
    return
  }
  func.func @transform_0(%arg0: i32) -> i32 {
    %c0_i32 = arith.constant 0 : i32
    %c0_i32_0 = arith.constant 0 : i32
    return %c0_i32 : i32
  }
  func.func @transform_1(%arg0: i32) -> (i32, i32) {
    %c0_i32 = arith.constant 0 : i32
    %c0_i32_0 = arith.constant 0 : i32
    return %arg0, %c0_i32 : i32, i32
  }
  func.func @transform_2(%arg0: i32) -> (i32, i32) {
    %c0_i32 = arith.constant 0 : i32
    %c0_i32_0 = arith.constant 0 : i32
    return %arg0, %c0_i32 : i32, i32
  }
}

</mosaic_0001>

<llo_original>
// kernel: tpu_custom_call.1
$region0: #{tpu_custom_call.1}
  #allocation0 [shape = 'u32[]', space=smem, size = 0x4, offset = 0x4, fixed_abs, tag = 'smem constant byte address 0x4 - core index']
  #allocation1 [shape = 'u32[144,128]{1,0:T(1,128)}', space=vmem, size = 0x12000, scoped, tag = 'internal scratch']
  #allocation2 [shape = 'f32[1]{0:T(128)S(6)}', space=smem, size = 0x200, scoped, tag = 'scoped memory for tpu_custom_call.1']
  %s0 = inlined_call_operand.<no memory space> [shape: f32[1], index: 0, kind: input, shape index: {}]
  %s1 = inlined_call_operand.hbm [shape: f32[2,1024], index: 1, kind: input, shape index: {}]
  %s2 = inlined_call_operand.hbm [shape: f32[2,1024], index: 2, kind: output, shape index: {}]
  %s3 = sld [smem:[#allocation0]]
  $region22: #{tpu_custom_call.1} parent=0
    _
  %s5 = ssub.s32 1, %s3
  %s6 = scalar_select 0, %s5, %s3
  %7 = sst [smem:[#allocation2]] %s0
  $region1: #{tpu_custom_call.1} parent=0
    #allocation3 [shape = 'u8[8192]{0}', space=vmem, size = 0x2000, scoped, tag = 'input window, operand 1, single buffered']
    #allocation4 [shape = 's32[1]{0}', space=sflag, size = 0x4, scoped, tag = 'scoped memory for tpu_custom_call.1']
    #allocation5 [shape = 's32[1]{0}', space=sflag, size = 0x4, scoped, tag = 'scoped memory for tpu_custom_call.1']
    #allocation6 [shape = 'u8[8192]{0}', space=vmem, size = 0x2000, scoped, tag = 'output window, operand 0, single buffered']
    %8 = vsyncpa [#allocation4], 0
    %9 = vsyncpa [#allocation5], 0
    // Predicated region
    $region2: #{tpu_custom_call.1} parent=1 // pred_check
      _
    $region3: #{tpu_custom_call.1} parent=1 // pred_check_branch
      %11 = sbr.rel (0) target = $region5
    $region4: #{tpu_custom_call.1} parent=1 // pred_region
      _
    $region5: #{tpu_custom_call.1} parent=1 // pred_fallthru
      _
    // Predicated region
    $region6: #{tpu_custom_call.1} parent=1 // pred_check
      _
    $region7: #{tpu_custom_call.1} parent=1 // pred_check_branch
      %13 = sbr.rel (0) target = $region9
    $region8: #{tpu_custom_call.1} parent=1 // pred_region
      %s15 = ssub.s32 256, 256
      %16 = vsyncadd [#allocation4], %s15
      %s18 = sshll.u32 [#allocation3], 4
      %s19 = int_to_ptr.vmem [resolvable:$true] %s18
      %21 = dma.hbm_to_vmem [thread:$0]  %s1, 256, %s19, [#allocation4]
    $region9: #{tpu_custom_call.1} parent=1 // pred_fallthru
      _
    // Predicated region
    $region10: #{tpu_custom_call.1} parent=1 // pred_check
      _
    $region11: #{tpu_custom_call.1} parent=1 // pred_check_branch
      %23 = sbr.rel (0) target = $region13
    $region12: #{tpu_custom_call.1} parent=1 // pred_region
      %24 = dma.done [#allocation4], 256
    $region13: #{tpu_custom_call.1} parent=1 // pred_fallthru
      _
    %v25 = vld [vmem:[#allocation3] sm:$0xff]
    %v26 = vld [vmem:[#allocation3 + $0x8] sm:$0xff]
    %s27 = sld [smem:[#allocation2]]
    %v28 = vstv %s27
    %vm29 = vcmp.ge.f32.partialorder %v25, %v28
    %vm30 = vcmp.ge.f32.partialorder %v26, %v28
    %v31 = vsel %vm29, 1, 0
    %v32 = vsel %vm30, 1, 0
    %v33 = vcvt.s32.f32 %v31
    %v34 = vcvt.s32.f32 %v32
    %35 = vst [vmem:[#allocation6] sm:$0xff] %v33
    %36 = vst [vmem:[#allocation6 + $0x8] sm:$0xff] %v34
    // Predicated region
    $region14: #{tpu_custom_call.1} parent=1 // pred_check
      _
    $region15: #{tpu_custom_call.1} parent=1 // pred_check_branch
      %38 = sbr.rel (0) target = $region17
    $region16: #{tpu_custom_call.1} parent=1 // pred_region
      %s40 = ssub.s32 256, 256
      %41 = vsyncadd [#allocation5], %s40
      %s43 = sshll.u32 [#allocation6], 4
      %s44 = int_to_ptr.vmem [resolvable:$true] %s43
      %46 = dma.vmem_to_hbm [thread:$0]  %s44, 256, %s2, [#allocation5]
    $region17: #{tpu_custom_call.1} parent=1 // pred_fallthru
      _
    // Predicated region
    $region18: #{tpu_custom_call.1} parent=1 // pred_check
      _
    $region19: #{tpu_custom_call.1} parent=1 // pred_check_branch
      %48 = sbr.rel (0) target = $region21
    $region20: #{tpu_custom_call.1} parent=1 // pred_region
      %49 = dma.done [#allocation5], 256
    $region21: #{tpu_custom_call.1} parent=1 // pred_fallthru
      _
    %50 = vsyncpa [#allocation4], 1
    %51 = vsyncpa [#allocation5], 1

</llo_original>
